<compile_context>
chip_gen: v7x
topology: tpu7x:2x2x1
jax: 0.10.0
libtpu: 0.0.40
codegen_flags: <defaults>
</compile_context>

<pallas_src>
import jax
import jax.numpy as jnp
from jax.experimental import pallas as pl
from jax.experimental.pallas import tpu as pltpu

EPS = 1e-5                              # nn.LayerNorm default
VMEM_LIMIT_BYTES = 56 * 1024 * 1024     # <= v7x 64 MiB physical, above v5e/v6e scoped defaults
VMEM_TILE_BUDGET = 40 * 1024 * 1024     # budget used when auto-shrinking the row tile


def _round_up(a, m):
    return (a + m - 1) // m * m


def prenorm_kernel(x_ref, gamma_ref, beta_ref, w_ref, b_ref, o_ref, y_ref):
    # Grid: (row tiles, H tiles); H is innermost and "arbitrary".
    # x_ref:     (TM, D)  input rows (native dtype)
    # gamma_ref: (1, D)   f32 (cast hoisted to the wrapper)
    # beta_ref:  (1, D)   f32
    # w_ref:     (D, TH)  Linear weight in its native dtype (bf16 feeds the MXU at full rate)
    # b_ref:     (1, TH)  f32
    # o_ref:     (TM, TH)
    # y_ref:     (TM, D)  VMEM scratch: LayerNorm output, cached across the H axis
    j = pl.program_id(1)

    @pl.when(j == 0)
    def _():
        # LayerNorm over the last dim, stats in f32 (biased variance, as in PyTorch).
        x = x_ref[...].astype(jnp.float32)
        mean = jnp.mean(x, axis=-1, keepdims=True)
        centered = x - mean
        var = jnp.mean(centered * centered, axis=-1, keepdims=True)
        inv = jax.lax.rsqrt(var + EPS)
        y = centered * inv * gamma_ref[...] + beta_ref[...]
        y_ref[...] = y.astype(y_ref.dtype)

    # fn: Linear(dim -> hidden) on the MXU, f32 accumulation.
    acc = jnp.dot(y_ref[...], w_ref[...], preferred_element_type=jnp.float32)
    o_ref[...] = (acc + b_ref[...]).astype(o_ref.dtype)


def _pick_tiles(N, D, H, x_item, w_item, o_item, tile_m, tile_h):
    # Row tile: multiple of 8 sublanes (16 for 2-byte dtypes, sublane packing).
    row_align = 16 if min(x_item, w_item) == 2 else 8
    tile_m = _round_up(tile_m, row_align)
    tile_m = min(tile_m, _round_up(N, row_align))

    # H tile: a multiple of 128 that divides H, else keep the full H (lane-dense output).
    if H % 128 == 0 and tile_h % 128 == 0 and H % tile_h == 0 and H > tile_h:
        th = tile_h
    else:
        th = H

    def vmem_usage(tm):
        return (2 * tm * D * x_item        # double-buffered x tile
                + 2 * D * th * w_item      # double-buffered W tile
                + 2 * tm * th * o_item     # double-buffered out tile
                + tm * D * w_item          # y scratch
                + 4 * tm * D * 4)          # f32 LayerNorm temporaries (slack)

    while vmem_usage(tile_m) > VMEM_TILE_BUDGET and tile_m > row_align:
        tile_m = _round_up(tile_m // 2, row_align)
    return tile_m, th


def prenorm_linear(x, gamma, beta, w, b, *, tile_m=512, tile_h=512):
    """x: (B, S, D) -> (B, S, H).  Fused LayerNorm(D) + Linear(D, H)."""
    B, S, D = x.shape
    Dw, H = w.shape
    assert Dw == D
    N = B * S

    x_item = jnp.dtype(x.dtype).itemsize
    w_item = jnp.dtype(w.dtype).itemsize
    o_item = x_item
    tm, th = _pick_tiles(N, D, H, x_item, w_item, o_item, tile_m, tile_h)

    # Pad rows so the grid divides evenly (zero rows normalize to beta; discarded below).
    n_pad = _round_up(N, tm)
    x2 = x.reshape(N, D)
    if n_pad != N:
        x2 = jnp.pad(x2, ((0, n_pad - N), (0, 0)))

    # Hoist parameter casts out of the kernel (done once, not per grid step).
    gamma2 = gamma.reshape(1, D).astype(jnp.float32)
    beta2 = beta.reshape(1, D).astype(jnp.float32)
    b2 = b.reshape(1, H).astype(jnp.float32)

    grid = (n_pad // tm, H // th)

    cost = pl.CostEstimate(
        flops=2 * n_pad * D * H,
        transcendentals=0,
        bytes_accessed=(n_pad * D * x_item + D * H * w_item
                        + n_pad * H * o_item + (2 * D + H) * 4),
    )

    out2 = pl.pallas_call(
        prenorm_kernel,
        out_shape=jax.ShapeDtypeStruct((n_pad, H), x.dtype),
        grid_spec=pltpu.PrefetchScalarGridSpec(
            num_scalar_prefetch=0,
            grid=grid,
            in_specs=[
                pl.BlockSpec((tm, D), lambda i, j: (i, 0)),   # x rows
                pl.BlockSpec((1, D), lambda i, j: (0, 0)),    # gamma (f32)
                pl.BlockSpec((1, D), lambda i, j: (0, 0)),    # beta  (f32)
                pl.BlockSpec((D, th), lambda i, j: (0, j)),   # W (native dtype)
                pl.BlockSpec((1, th), lambda i, j: (0, j)),   # bias (f32)
            ],
            out_specs=pl.BlockSpec((tm, th), lambda i, j: (i, j)),
            scratch_shapes=[pltpu.VMEM((tm, D), w.dtype)],    # cached LayerNorm output
        ),
        compiler_params=pltpu.CompilerParams(
            # H axis is "arbitrary": y scratch is filled at j == 0 and reused
            # for the remaining H tiles of the same row tile.
            dimension_semantics=("parallel", "arbitrary"),
            vmem_limit_bytes=VMEM_LIMIT_BYTES,
        ),
        cost_estimate=cost,
    )(x2, gamma2, beta2, w, b2)

    return out2[:N].reshape(B, S, H)


def prenorm_ref(x, gamma, beta, w, b):
    xf = x.astype(jnp.float32)
    mean = jnp.mean(xf, axis=-1, keepdims=True)
    var = jnp.mean((xf - mean) ** 2, axis=-1, keepdims=True)
    xn = (xf - mean) * jax.lax.rsqrt(var + EPS)
    y = xn * gamma.astype(jnp.float32) + beta.astype(jnp.float32)
    out = y @ w.astype(jnp.float32) + b.astype(jnp.float32)
    return out.astype(x.dtype)


if __name__ == "__main__":
    key = jax.random.PRNGKey(0)

    # --- Test 1: canonical small f32 shape ---------------------------------
    B, S, D, H = 2, 8, 32, 32
    kx, kw, kb = jax.random.split(key, 3)
    x = jax.random.normal(kx, (B, S, D), dtype=jnp.float32)
    gamma = jnp.ones((D,), jnp.float32)           # PyTorch LayerNorm default init
    beta = jnp.zeros((D,), jnp.float32)
    w = jax.random.normal(kw, (D, H), dtype=jnp.float32) * 0.02
    b = jax.random.normal(kb, (H,), dtype=jnp.float32) * 0.02

    out = jax.block_until_ready(prenorm_linear(x, gamma, beta, w, b))
    ref = prenorm_ref(x, gamma, beta, w, b)
    assert out.shape == (B, S, H)
    assert jnp.allclose(out, ref, atol=1e-4, rtol=1e-4)

    # --- Test 2: row count not divisible by the tile (exercises padding) ----
    B2, S2, D2, H2 = 1, 13, 32, 64
    k1, k2, k3 = jax.random.split(jax.random.PRNGKey(1), 3)
    x_b = jax.random.normal(k1, (B2, S2, D2), dtype=jnp.float32)
    g_b = jnp.ones((D2,), jnp.float32)
    be_b = jnp.zeros((D2,), jnp.float32)
    w_b = jax.random.normal(k2, (D2, H2), dtype=jnp.float32) * 0.02
    b_b = jax.random.normal(k3, (H2,), dtype=jnp.float32) * 0.02
    out_b = jax.block_until_ready(prenorm_linear(x_b, g_b, be_b, w_b, b_b))
    ref_b = prenorm_ref(x_b, g_b, be_b, w_b, b_b)
    assert out_b.shape == (B2, S2, H2)
    assert jnp.allclose(out_b, ref_b, atol=1e-4, rtol=1e-4)

    # --- Test 3: bf16 path (MXU operands stay bf16, f32 accumulation) -------
    B3, S3, D3, H3 = 2, 24, 128, 256
    k4, k5, k6 = jax.random.split(jax.random.PRNGKey(2), 3)
    x_c = jax.random.normal(k4, (B3, S3, D3), dtype=jnp.float32).astype(jnp.bfloat16)
    g_c = jnp.ones((D3,), jnp.bfloat16)
    be_c = jnp.zeros((D3,), jnp.bfloat16)
    w_c = (jax.random.normal(k5, (D3, H3), dtype=jnp.float32) * 0.02).astype(jnp.bfloat16)
    b_c = (jax.random.normal(k6, (H3,), dtype=jnp.float32) * 0.02).astype(jnp.bfloat16)
    out_c = jax.block_until_ready(prenorm_linear(x_c, g_c, be_c, w_c, b_c))
    ref_c = prenorm_ref(x_c, g_c, be_c, w_c, b_c)
    assert out_c.shape == (B3, S3, H3)
    assert jnp.allclose(out_c.astype(jnp.float32), ref_c.astype(jnp.float32),
                        atol=2e-2, rtol=2e-2)

    print("KERNEL_OK")
</pallas_src>

<mosaic_0001>
module attributes {stable_mosaic.version = 11 : i64} {
  func.func @prenorm_kernel(%arg0: i32, %arg1: i32, %arg2: memref<16x32xf32, #tpu.memory_space<vmem>>, %arg3: memref<1x32xf32, #tpu.memory_space<vmem>>, %arg4: memref<1x32xf32, #tpu.memory_space<vmem>>, %arg5: memref<32x32xf32, #tpu.memory_space<vmem>>, %arg6: memref<1x32xf32, #tpu.memory_space<vmem>>, %arg7: memref<16x32xf32, #tpu.memory_space<vmem>>, %arg8: memref<16x32xf32, #tpu.memory_space<vmem>>) attributes {dimension_semantics = [#tpu.dimension_semantics<parallel>, #tpu.dimension_semantics<arbitrary>], iteration_bounds = array<i64: 1, 1>, scalar_prefetch = 0 : i64, scratch_operands = 1 : i64, tpu.core_type = #tpu.core_type<tc>, window_params = [{transform_indices = @transform_0, window_bounds = array<i64: 16, 32>}, {pipeline_mode = #tpu.pipeline_mode<synchronous>, transform_indices = @transform_1, window_bounds = array<i64: 1, 32>}, {pipeline_mode = #tpu.pipeline_mode<synchronous>, transform_indices = @transform_2, window_bounds = array<i64: 1, 32>}, {transform_indices = @transform_3, window_bounds = array<i64: 32, 32>}, {transform_indices = @transform_4, window_bounds = array<i64: 1, 32>}, {transform_indices = @transform_5, window_bounds = array<i64: 16, 32>}]} {
    %c0_i32 = arith.constant 0 : i32
    %0 = arith.cmpi eq, %arg1, %c0_i32 : i32
    %1 = arith.extui %0 : i1 to i32
    %c0_i32_0 = arith.constant 0 : i32
    %2 = arith.cmpi ne, %1, %c0_i32_0 : i32
    scf.if %2 {
      %c0_8 = arith.constant 0 : index
      %c0_9 = arith.constant 0 : index
      %10 = vector.load %arg2[%c0_8, %c0_9] : memref<16x32xf32, #tpu.memory_space<vmem>>, vector<16x32xf32>
      %cst_10 = arith.constant dense<0.000000e+00> : vector<16xf32>
      %11 = vector.multi_reduction <add>, %10, %cst_10 [1] : vector<16x32xf32> to vector<16xf32>
      %12 = vector.shape_cast %11 : vector<16xf32> to vector<16x1xf32>
      %cst_11 = arith.constant 3.200000e+01 : f32
      %13 = vector.broadcast %cst_11 : f32 to vector<16x1xf32>
      %14 = arith.divf %12, %13 : vector<16x1xf32>
      %15 = vector.broadcast %14 : vector<16x1xf32> to vector<16x32xf32>
      %16 = arith.subf %10, %15 : vector<16x32xf32>
      %17 = arith.mulf %16, %16 : vector<16x32xf32>
      %cst_12 = arith.constant dense<0.000000e+00> : vector<16xf32>
      %18 = vector.multi_reduction <add>, %17, %cst_12 [1] : vector<16x32xf32> to vector<16xf32>
      %19 = vector.shape_cast %18 : vector<16xf32> to vector<16x1xf32>
      %cst_13 = arith.constant 3.200000e+01 : f32
      %20 = vector.broadcast %cst_13 : f32 to vector<16x1xf32>
      %21 = arith.divf %19, %20 : vector<16x1xf32>
      %cst_14 = arith.constant 9.99999974E-6 : f32
      %22 = vector.broadcast %cst_14 : f32 to vector<16x1xf32>
      %23 = arith.addf %21, %22 : vector<16x1xf32>
      %24 = math.rsqrt %23 : vector<16x1xf32>
      %25 = vector.broadcast %24 : vector<16x1xf32> to vector<16x32xf32>
      %26 = arith.mulf %16, %25 : vector<16x32xf32>
      %c0_15 = arith.constant 0 : index
      %c0_16 = arith.constant 0 : index
      %27 = vector.load %arg3[%c0_15, %c0_16] : memref<1x32xf32, #tpu.memory_space<vmem>>, vector<1x32xf32>
      %28 = vector.broadcast %27 : vector<1x32xf32> to vector<16x32xf32>
      %29 = arith.mulf %26, %28 : vector<16x32xf32>
      %c0_17 = arith.constant 0 : index
      %c0_18 = arith.constant 0 : index
      %30 = vector.load %arg4[%c0_17, %c0_18] : memref<1x32xf32, #tpu.memory_space<vmem>>, vector<1x32xf32>
      %31 = vector.broadcast %30 : vector<1x32xf32> to vector<16x32xf32>
      %32 = arith.addf %29, %31 : vector<16x32xf32>
      %c0_19 = arith.constant 0 : index
      %c0_20 = arith.constant 0 : index
      %33 = vector.load %arg8[%c0_19, %c0_20] : memref<16x32xf32, #tpu.memory_space<vmem>>, vector<16x32xf32>
      tpu.vector_store %arg8[%c0_19, %c0_20], %32 {strides = array<i32>} : memref<16x32xf32, #tpu.memory_space<vmem>>, vector<16x32xf32>,
    } else {
    }
    %c0 = arith.constant 0 : index
    %c0_1 = arith.constant 0 : index
    %3 = vector.load %arg8[%c0, %c0_1] : memref<16x32xf32, #tpu.memory_space<vmem>>, vector<16x32xf32>
    %c0_2 = arith.constant 0 : index
    %c0_3 = arith.constant 0 : index
    %4 = vector.load %arg5[%c0_2, %c0_3] : memref<32x32xf32, #tpu.memory_space<vmem>>, vector<32x32xf32>
    %cst = arith.constant dense<0.000000e+00> : vector<16x32xf32>
    %5 = tpu.matmul %3, %4, %cst {dimension_numbers = #tpu.dot_dimension_numbers<[1], [0], [0], [1], [0, 0, 1, 1], [], []>} : vector<16x32xf32>, vector<32x32xf32>, vector<16x32xf32> -> vector<16x32xf32>
    %c0_4 = arith.constant 0 : index
    %c0_5 = arith.constant 0 : index
    %6 = vector.load %arg6[%c0_4, %c0_5] : memref<1x32xf32, #tpu.memory_space<vmem>>, vector<1x32xf32>
    %7 = vector.broadcast %6 : vector<1x32xf32> to vector<16x32xf32>
    %8 = arith.addf %5, %7 : vector<16x32xf32>
    %c0_6 = arith.constant 0 : index
    %c0_7 = arith.constant 0 : index
    %9 = vector.load %arg7[%c0_6, %c0_7] : memref<16x32xf32, #tpu.memory_space<vmem>>, vector<16x32xf32>
    tpu.vector_store %arg7[%c0_6, %c0_7], %8 {strides = array<i32>} : memref<16x32xf32, #tpu.memory_space<vmem>>, vector<16x32xf32>,
    return
  }
  func.func @transform_0(%arg0: i32, %arg1: i32) -> (i32, i32) {
    %c0_i32 = arith.constant 0 : i32
    %c0_i32_0 = arith.constant 0 : i32
    return %arg0, %c0_i32 : i32, i32
  }
  func.func @transform_1(%arg0: i32, %arg1: i32) -> (i32, i32) {
    %c0_i32 = arith.constant 0 : i32
    %c0_i32_0 = arith.constant 0 : i32
    %c0_i32_1 = arith.constant 0 : i32
    return %c0_i32, %c0_i32_0 : i32, i32
  }
  func.func @transform_2(%arg0: i32, %arg1: i32) -> (i32, i32) {
    %c0_i32 = arith.constant 0 : i32
    %c0_i32_0 = arith.constant 0 : i32
    %c0_i32_1 = arith.constant 0 : i32
    return %c0_i32, %c0_i32_0 : i32, i32
  }
  func.func @transform_3(%arg0: i32, %arg1: i32) -> (i32, i32) {
    %c0_i32 = arith.constant 0 : i32
    %c0_i32_0 = arith.constant 0 : i32
    return %c0_i32, %arg1 : i32, i32
  }
  func.func @transform_4(%arg0: i32, %arg1: i32) -> (i32, i32) {
    %c0_i32 = arith.constant 0 : i32
    %c0_i32_0 = arith.constant 0 : i32
    return %c0_i32, %arg1 : i32, i32
  }
  func.func @transform_5(%arg0: i32, %arg1: i32) -> (i32, i32) {
    %c0_i32 = arith.constant 0 : i32
    return %arg0, %arg1 : i32, i32
  }
}

</mosaic_0001>

<llo_original>
// kernel: tpu_custom_call.1
$region0: #{tpu_custom_call.1}
  #allocation0 [shape = 'u32[]', space=smem, size = 0x4, offset = 0x4, fixed_abs, tag = 'smem constant byte address 0x4 - core index']
  #allocation1 [shape = 'u32[144,128]{1,0:T(1,128)}', space=vmem, size = 0x12000, scoped, tag = 'internal scratch']
  #allocation2 [shape = 'f32[16,32]{1,0:T(8,128)}', space=vmem, size = 0x2000, scoped, tag = 'scratch operand']
  %s0 = inlined_call_operand.hbm [shape: f32[16,32], index: 0, kind: input, shape index: {}]
  %s1 = inlined_call_operand.vmem [shape: f32[1,32], index: 1, kind: input, shape index: {}]
  %s2 = inlined_call_operand.vmem [shape: f32[1,32], index: 2, kind: input, shape index: {}]
  %s3 = inlined_call_operand.hbm [shape: f32[32,32], index: 3, kind: input, shape index: {}]
  %s4 = inlined_call_operand.vmem [shape: f32[1,32], index: 4, kind: input, shape index: {}]
  %s5 = inlined_call_operand.hbm [shape: f32[16,32], index: 5, kind: output, shape index: {}]
  %s6 = sld [smem:[#allocation0]]
  $region42: #{tpu_custom_call.1} parent=0
    _
  %s8 = ssub.s32 1, %s6
  %s9 = scalar_select 0, %s8, %s6
  $region1: #{tpu_custom_call.1} parent=0
    #allocation3 [shape = 'u8[8192]{0}', space=vmem, size = 0x2000, scoped, tag = 'input window, operand 0, single buffered']
    #allocation4 [shape = 's32[1]{0}', space=sflag, size = 0x4, scoped, tag = 'scoped memory for tpu_custom_call.1']
    #allocation5 [shape = 's32[1]{0}', space=sflag, size = 0x4, scoped, tag = 'scoped memory for tpu_custom_call.1']
    #allocation6 [shape = 'u8[16384]{0}', space=vmem, size = 0x4000, scoped, tag = 'input window, operand 3, single buffered']
    #allocation7 [shape = 's32[1]{0}', space=sflag, size = 0x4, scoped, tag = 'scoped memory for tpu_custom_call.1']
    #allocation8 [shape = 'u8[8192]{0}', space=vmem, size = 0x2000, scoped, tag = 'output window, operand 0, single buffered']
    %10 = vsyncpa [#allocation4], 0
    %11 = vsyncpa [#allocation7], 0
    %12 = vsyncpa [#allocation5], 0
    // Predicated region
    $region2: #{tpu_custom_call.1} parent=1 // pred_check
      _
    $region3: #{tpu_custom_call.1} parent=1 // pred_check_branch
      %14 = sbr.rel (0) target = $region5
    $region4: #{tpu_custom_call.1} parent=1 // pred_region
      %s16 = ssub.s32 256, 256
      %17 = vsyncadd [#allocation4], %s16
      %s18 = sshll.u32 [#allocation3], 4
      %s19 = int_to_ptr.vmem [resolvable:$true] %s18
      %24 = dma.hbm_to_vmem [thread:$0]  %s0, 256, %s19, [#allocation4], 128, 128, 8
    $region5: #{tpu_custom_call.1} parent=1 // pred_fallthru
      _
    // Predicated region
    $region6: #{tpu_custom_call.1} parent=1 // pred_check
      _
    $region7: #{tpu_custom_call.1} parent=1 // pred_check_branch
      %26 = sbr.rel (0) target = $region9
    $region8: #{tpu_custom_call.1} parent=1 // pred_region
      _
    $region9: #{tpu_custom_call.1} parent=1 // pred_fallthru
      _
    // Predicated region
    $region10: #{tpu_custom_call.1} parent=1 // pred_check
      _
    $region11: #{tpu_custom_call.1} parent=1 // pred_check_branch
      %28 = sbr.rel (0) target = $region13
    $region12: #{tpu_custom_call.1} parent=1 // pred_region
      _
    $region13: #{tpu_custom_call.1} parent=1 // pred_fallthru
      _
    // Predicated region
    $region14: #{tpu_custom_call.1} parent=1 // pred_check
      _
    $region15: #{tpu_custom_call.1} parent=1 // pred_check_branch
      %30 = sbr.rel (0) target = $region17
    $region16: #{tpu_custom_call.1} parent=1 // pred_region
      %s32 = ssub.s32 512, 512
      %33 = vsyncadd [#allocation7], %s32
      %s34 = sshll.u32 [#allocation6], 4
      %s35 = int_to_ptr.vmem [resolvable:$true] %s34
      %40 = dma.hbm_to_vmem [thread:$0]  %s3, 512, %s35, [#allocation7], 128, 128, 8
    $region17: #{tpu_custom_call.1} parent=1 // pred_fallthru
      _
    // Predicated region
    $region18: #{tpu_custom_call.1} parent=1 // pred_check
      _
    $region19: #{tpu_custom_call.1} parent=1 // pred_check_branch
      %42 = sbr.rel (0) target = $region21
    $region20: #{tpu_custom_call.1} parent=1 // pred_region
      _
    $region21: #{tpu_custom_call.1} parent=1 // pred_fallthru
      _
    // Predicated region
    $region22: #{tpu_custom_call.1} parent=1 // pred_check
      _
    $region23: #{tpu_custom_call.1} parent=1 // pred_check_branch
      %44 = sbr.rel (0) target = $region25
    $region24: #{tpu_custom_call.1} parent=1 // pred_region
      %45 = dma.done [#allocation4], 256
    $region25: #{tpu_custom_call.1} parent=1 // pred_fallthru
      _
    // Predicated region
    $region26: #{tpu_custom_call.1} parent=1 // pred_check
      _
    $region27: #{tpu_custom_call.1} parent=1 // pred_check_branch
      %47 = sbr.rel (0) target = $region29
    $region28: #{tpu_custom_call.1} parent=1 // pred_region
      %48 = dma.done [#allocation7], 512
    $region29: #{tpu_custom_call.1} parent=1 // pred_fallthru
      _
    %p49 = scmp.eq.s32.totalorder 0, 0
    // Predicated region
    $region30: #{tpu_custom_call.1} parent=1 // pred_check
      %p50 = pneg %p49
    $region31: #{tpu_custom_call.1} parent=1 // pred_check_branch
      %52 = sbr.rel (%p50) target = $region33
    $region32: #{tpu_custom_call.1} parent=1 // pred_region
      %v53 = vld [vmem:[#allocation3] sm:$0xff]
      %v54 = vld [vmem:[#allocation3 + $0x8] sm:$0xff]
      %vm55 = vcmask 261120
      %v56 = vsel %vm55, %v53, 0.0
      %57 = vadd.xlane.f32.xlu0 %v56
      %v58 = vpop.xlane.xlu0 %57
      %v59 = vsel %vm55, %v54, 0.0
      %60 = vadd.xlane.f32.xlu0 %v59
      %v61 = vpop.xlane.xlu0 %60
      %v62 = vrcp.pop 32.0
      %v63 = vmul.f32 %v58, %v62
      %v64 = vmul.f32 %v61, %v62
      %v65 = vsub.f32 %v53, %v63
      %v66 = vsub.f32 %v54, %v64
      %v67 = vmul.f32 %v65, %v65
      %v68 = vmul.f32 %v66, %v66
      %v69 = vsel %vm55, %v67, 0.0
      %70 = vadd.xlane.f32.xlu0 %v69
      %v71 = vpop.xlane.xlu0 %70
      %v72 = vsel %vm55, %v68, 0.0
      %73 = vadd.xlane.f32.xlu0 %v72
      %v74 = vpop.xlane.xlu0 %73
      %v75 = vmul.f32 %v71, %v62
      %v76 = vmul.f32 %v74, %v62
      %v77 = vadd.f32 %v75, 1e-05
      %v78 = vadd.f32 %v76, 1e-05
      %v79 = vrsqrt.pop %v77
      %v80 = vrsqrt.pop %v78
      %v81 = vmul.f32 %v65, %v79
      %v82 = vmul.f32 %v66, %v80
      %v83 = vld [vmem:[%s1] sm:$0x1]
      %v85 = vlaneseq
      %v86 = vshrl.u32 %v85, 7
      %v87 = vsub.s32 0, %v86
      %v88 = vrot.slane %v83, %v87
      %v90 = vmul.f32 %v81, %v88
      %v91 = vmul.f32 %v82, %v88
      %v92 = vld [vmem:[%s2] sm:$0x1]
      %v94 = vlaneseq
      %v95 = vshrl.u32 %v94, 7
      %v96 = vsub.s32 0, %v95
      %v97 = vrot.slane %v92, %v96
      %v99 = vadd.f32 %v90, %v97
      %v100 = vadd.f32 %v91, %v97
      %101 = vst.msk [vmem:[#allocation2] sm:$0xff] %vm55, %v99
      %102 = vst.msk [vmem:[#allocation2 + $0x8] sm:$0xff] %vm55, %v100
    $region33: #{tpu_custom_call.1} parent=1 // pred_fallthru
      _
    %v103 = vld [vmem:[#allocation2] sm:$0xff]
    %v104 = vld [vmem:[#allocation2 + $0x8] sm:$0xff]
    %v105 = vld [vmem:[#allocation6] sm:$0xff]
    %v106 = vld [vmem:[#allocation6 + $0x8] sm:$0xff]
    %v107 = vld [vmem:[#allocation6 + $0x10] sm:$0xff]
    %v108 = vld [vmem:[#allocation6 + $0x18] sm:$0xff]
    %v109 = vld [vmem:[%s4] sm:$0x1]
    %v111 = vlaneseq
    %v112 = vshrl.u32 %v111, 7
    %v113 = vsub.s32 0, %v112
    %v114 = vrot.slane %v109, %v113
    %vm116 = vcmask 261120
    %v118 = vsel %vm116, %v103, 0
    %v121 = vsel %vm116, %v104, 0
    %123 = vmatprep.subr.mxu0 0.0
    %124 = vmatpush1.msra.mxu0 %v105
    %125 = vmatprep.subr.mxu0 0.0
    %126 = vmatpush1.msra.mxu0 %v106
    %127 = vmatprep.subr.mxu0 0.0
    %128 = vmatpush1.msra.mxu0 %v107
    %129 = vmatprep.subr.mxu0 0.0
    %130 = vmatpush1.msra.mxu0 %v108
    %131 = vmatprep.subr.mxu0 0.0
    %132 = vmatpush1.msra.mxu0 0.0
    %133 = vmatprep.subr.mxu0 0.0
    %134 = vmatpush1.msra.mxu0 0.0
    %135 = vmatprep.subr.mxu0 0.0
    %136 = vmatpush1.msra.mxu0 0.0
    %137 = vmatprep.subr.mxu0 0.0
    %138 = vmatpush1.msra.mxu0 0.0
    %139 = vmatprep.subr.mxu0 0.0
    %140 = vmatpush1.msra.mxu0 0.0
    %141 = vmatprep.subr.mxu0 0.0
    %142 = vmatpush1.msra.mxu0 0.0
    %143 = vmatprep.subr.mxu0 0.0
    %144 = vmatpush1.msra.mxu0 0.0
    %145 = vmatprep.subr.mxu0 0.0
    %146 = vmatpush1.msra.mxu0 0.0
    %147 = vmatprep.subr.mxu0 0.0
    %148 = vmatpush1.msra.mxu0 0.0
    %149 = vmatprep.subr.mxu0 0.0
    %150 = vmatpush1.msra.mxu0 0.0
    %151 = vmatprep.subr.mxu0 0.0
    %152 = vmatpush1.msra.mxu0 0.0
    %153 = vmatprep.subr.mxu0 0.0
    %154 = vmatpush1.msra.mxu0 0.0
    %155 = vmatprep.subr.mxu0 0.0
    %156 = vmatpush1.msra.mxu0 0.0
    %157 = vmatprep.subr.mxu0 0.0
    %158 = vmatpush1.msra.mxu0 0.0
    %159 = vmatprep.subr.mxu0 0.0
    %160 = vmatpush1.msra.mxu0 0.0
    %161 = vmatprep.subr.mxu0 0.0
    %162 = vmatpush1.msra.mxu0 0.0
    %163 = vmatprep.subr.mxu0 0.0
    %164 = vmatpush1.msra.mxu0 0.0
    %165 = vmatprep.subr.mxu0 0.0
    %166 = vmatpush1.msra.mxu0 0.0
    %167 = vmatprep.subr.mxu0 0.0
    %168 = vmatpush1.msra.mxu0 0.0
    %169 = vmatprep.subr.mxu0 0.0
    %170 = vmatpush1.msra.mxu0 0.0
    %171 = vmatprep.subr.mxu0 0.0
    %172 = vmatpush1.msra.mxu0 0.0
    %173 = vmatprep.subr.mxu0 0.0
    %174 = vmatpush1.msra.mxu0 0.0
    %175 = vmatprep.subr.mxu0 0.0
    %176 = vmatpush1.msra.mxu0 0.0
    %177 = vmatprep.subr.mxu0 0.0
    %178 = vmatpush1.msra.mxu0 0.0
    %179 = vmatprep.subr.mxu0 0.0
    %180 = vmatpush1.msra.mxu0 0.0
    %181 = vmatprep.subr.mxu0 0.0
    %182 = vmatpush1.msra.mxu0 0.0
    %183 = vmatprep.subr.mxu0 0.0
    %184 = vmatpush1.msra.mxu0 0.0
    %185 = vmatprep.subr.mxu0 0.0
    %186 = vmatpush1.msra.mxu0 0.0
    %187 = vmatprep.mubr.f32.mxu0 0.0
    %188 = vmatmul.mubr.f32.gmra.mrb[0].mxu0 %v118
    %v189 = vpop.f32.mrb[0].mxu0
    %v190 = vadd.f32 %v114, %v189
    %v191 = vpop.f32.mrb[0].mxu0
    %192 = vmatprep.mubr.f32.mxu0 0.0
    %193 = vmatmul.mubr.f32.gmra.mrb[0].mxu0 %v121
    %v194 = vpop.f32.mrb[0].mxu0
    %v195 = vadd.f32 %v114, %v194
    %v196 = vpop.f32.mrb[0].mxu0
    %197 = vdwg.mxu0
    %198 = vst.msk [vmem:[#allocation8] sm:$0xff] %vm116, %v190
    %199 = vst.msk [vmem:[#allocation8 + $0x8] sm:$0xff] %vm116, %v195
    // Predicated region
    $region34: #{tpu_custom_call.1} parent=1 // pred_check
      _
    $region35: #{tpu_custom_call.1} parent=1 // pred_check_branch
      %201 = sbr.rel (0) target = $region37
    $region36: #{tpu_custom_call.1} parent=1 // pred_region
      %s203 = ssub.s32 256, 256
      %204 = vsyncadd [#allocation5], %s203
      %s205 = sshll.u32 [#allocation8], 4
      %s206 = int_to_ptr.vmem [resolvable:$true] %s205
      %211 = dma.vmem_to_hbm [thread:$0]  %s206, 256, %s5, [#allocation5], 128, 128, 8
    $region37: #{tpu_custom_call.1} parent=1 // pred_fallthru
      _
    // Predicated region
    $region38: #{tpu_custom_call.1} parent=1 // pred_check
      _
    $region39: #{tpu_custom_call.1} parent=1 // pred_check_branch
      %213 = sbr.rel (0) target = $region41
    $region40: #{tpu_custom_call.1} parent=1 // pred_region
      %214 = dma.done [#allocation5], 256
    $region41: #{tpu_custom_call.1} parent=1 // pred_fallthru
      _
    %215 = vsyncpa [#allocation4], 1
    %216 = vsyncpa [#allocation7], 1
    %217 = vsyncpa [#allocation5], 1

</llo_original>
